<compile_context>
chip_gen: v7x
topology: tpu7x:2x2x1
jax: 0.10.0
libtpu: 0.0.40
codegen_flags: <defaults>
</compile_context>

<pallas_src>
import functools

import jax
import jax.numpy as jnp
from jax.experimental import pallas as pl
from jax.experimental.pallas import tpu as pltpu

H = 30
C = 10
D = 28 * 28  # input_size

H_PAD = 128  # lane-dense hidden width (extra cols are exact zeros -> ReLU(0)=0)


def _round_up(x, m):
    return ((x + m - 1) // m) * m


def mlp_kernel(x_ref, w1_ref, b1_ref, w2_ref, b2_ref, o_ref):
    # In-VMEM cast of the streamed X tile to the MXU dtype (free on the VPU,
    # hidden under the X DMA); weights are already stored in that dtype.
    x = x_ref[...].astype(w1_ref.dtype)
    # Layer 1: X @ W1 on the MXU, f32 accumulation; bias + ReLU in f32 on the VPU.
    h = jnp.dot(x, w1_ref[...], preferred_element_type=jnp.float32)
    h = jnp.maximum(h + b1_ref[...], 0.0)
    # Layer 2: H @ W2 + b2 (N=10 output, stores are masked but tiny).
    o = jnp.dot(h.astype(w2_ref.dtype), w2_ref[...], preferred_element_type=jnp.float32)
    o_ref[...] = (o + b2_ref[...]).astype(o_ref.dtype)


def _pad_params(w1, b1, w2, b2, mxu_dtype):
    """Pad hidden dim to lane-dense 128 and cast weights (once) to the MXU dtype.

    Zero padding keeps the math exact: extra hidden columns are 0 through ReLU and
    hit all-zero rows of W2.
    """
    w1p = jnp.zeros((D, H_PAD), w1.dtype).at[:, :H].set(w1).astype(mxu_dtype)
    b1p = jnp.zeros((1, H_PAD), jnp.float32).at[0, :H].set(b1)
    w2p = jnp.zeros((H_PAD, C), w2.dtype).at[:H, :].set(w2).astype(mxu_dtype)
    b2p = b2.reshape(1, C).astype(jnp.float32)
    return w1p, b1p, w2p, b2p


def _pick_tb(B, tb):
    """Clamp the batch tile and rebalance the step count for v7x's two TensorCores."""
    tb = max(8, _round_up(min(tb, _round_up(B, 8)), 8))
    n_steps = pl.cdiv(B, tb)
    # An odd step count (>1) leaves one v7x TensorCore a whole tile behind on the
    # single "parallel" axis; shrink tb slightly so the count comes out even.
    if n_steps > 1 and n_steps % 2 == 1:
        tb = _round_up(pl.cdiv(B, n_steps + 1), 8)
        n_steps = pl.cdiv(B, tb)
    return tb, n_steps


def _vmem_limit_bytes(tb, x_itemsize, mxu_itemsize):
    x_dbuf = 2 * tb * D * x_itemsize                       # streamed X (double-buffered)
    o_dbuf = 2 * tb * C * 4                                 # (B, 10) f32 output tiles
    w_resident = 2 * ((D * H_PAD + H_PAD * C) * mxu_itemsize + (H_PAD + C) * 4)
    need = x_dbuf + o_dbuf + w_resident + (4 << 20)         # + headroom
    # At least the common scoped default, never above v7x's 64 MiB physical VMEM.
    return int(min(max(need, 32 << 20), 64 << 20))


@functools.partial(jax.jit, static_argnames=("tb", "force_pallas", "mxu_dtype"))
def mlp_forward(x, w1, b1, w2, b2, *, tb=1024, force_pallas=False,
                mxu_dtype=jnp.bfloat16):
    """x: (B, D) f32 or bf16. w1: (D, H), b1: (H,), w2: (H, C), b2: (C,)."""
    B, Din = x.shape
    assert Din == D

    # Tiny batches: fixed Pallas/grid overhead dominates ~25 KB of work -> plain XLA.
    if B < 64 and not force_pallas:
        xm = x.astype(mxu_dtype)
        h = jnp.maximum(
            jnp.dot(xm, w1.astype(mxu_dtype), preferred_element_type=jnp.float32) + b1, 0.0)
        o = jnp.dot(h.astype(mxu_dtype), w2.astype(mxu_dtype),
                    preferred_element_type=jnp.float32) + b2
        return o.astype(x.dtype)

    tb, n_steps = _pick_tb(B, tb)
    w1p, b1p, w2p, b2p = _pad_params(w1, b1, w2, b2, mxu_dtype)

    out = pl.pallas_call(
        mlp_kernel,
        out_shape=jax.ShapeDtypeStruct((B, C), x.dtype),
        grid_spec=pltpu.PrefetchScalarGridSpec(
            num_scalar_prefetch=0,
            grid=(n_steps,),                                   # ragged last block is masked
            in_specs=[
                pl.BlockSpec((tb, D), lambda i: (i, 0)),       # X tile (streamed)
                pl.BlockSpec((D, H_PAD), lambda i: (0, 0)),    # W1 (VMEM-resident)
                pl.BlockSpec((1, H_PAD), lambda i: (0, 0)),    # b1
                pl.BlockSpec((H_PAD, C), lambda i: (0, 0)),    # W2
                pl.BlockSpec((1, C), lambda i: (0, 0)),        # b2
            ],
            out_specs=pl.BlockSpec((tb, C), lambda i: (i, 0)),  # direct (B, 10) output
        ),
        compiler_params=pltpu.CompilerParams(
            dimension_semantics=("parallel",),
            vmem_limit_bytes=_vmem_limit_bytes(
                tb, x.dtype.itemsize, jnp.dtype(mxu_dtype).itemsize),
        ),
    )(x, w1p, b1p, w2p, b2p)
    return out


def _init_params(key):
    """Deterministic init mimicking nn.Linear's uniform(-1/sqrt(fan_in), 1/sqrt(fan_in))."""
    k1, k2, k3, k4 = jax.random.split(key, 4)
    bound1 = 1.0 / jnp.sqrt(jnp.float32(D))
    bound2 = 1.0 / jnp.sqrt(jnp.float32(H))
    # Stored transposed relative to PyTorch (in, out) so the kernel computes X @ W.
    w1 = jax.random.uniform(k1, (D, H), jnp.float32, -bound1, bound1)
    b1 = jax.random.uniform(k2, (H,), jnp.float32, -bound1, bound1)
    w2 = jax.random.uniform(k3, (H, C), jnp.float32, -bound2, bound2)
    b2 = jax.random.uniform(k4, (C,), jnp.float32, -bound2, bound2)
    return w1, b1, w2, b2


def _ref(x, w1, b1, w2, b2, mxu_dtype=jnp.float32):
    """Pure-JAX reference; mxu_dtype mirrors the kernel's matmul precision."""
    h = jnp.dot(x.astype(mxu_dtype), w1.astype(mxu_dtype),
                preferred_element_type=jnp.float32)
    h = jnp.maximum(h + b1, 0.0)
    o = jnp.dot(h.astype(mxu_dtype), w2.astype(mxu_dtype),
                preferred_element_type=jnp.float32)
    return o + b2


if __name__ == "__main__":
    key = jax.random.PRNGKey(0)
    kx1, kx2, kp = jax.random.split(key, 3)
    w1, b1, w2, b2 = _init_params(kp)

    # 1) Small-batch check (forces the Pallas path; single grid step).
    B_small = 8
    x_small = jax.random.normal(kx1, (B_small, D), jnp.float32)
    out_small = jax.block_until_ready(
        mlp_forward(x_small, w1, b1, w2, b2, force_pallas=True))
    assert out_small.shape == (B_small, C)
    # Matched-precision reference (tight) and pure-f32 reference (bf16-level tolerance).
    assert jnp.allclose(out_small, _ref(x_small, w1, b1, w2, b2, jnp.bfloat16),
                        atol=2e-3, rtol=2e-3)
    assert jnp.allclose(out_small, _ref(x_small, w1, b1, w2, b2),
                        atol=3e-2, rtol=3e-2)

    # 2) Multi-step, ragged batch: no wrapper-side padding, no output slice;
    #    tb=64 -> 5 steps would be odd, rebalanced to 6 even steps (v7x parity),
    #    last block partially out of bounds and masked by Pallas.
    B_big = 300
    x_big = jax.random.normal(kx2, (B_big, D), jnp.float32)
    out_big = jax.block_until_ready(mlp_forward(x_big, w1, b1, w2, b2, tb=64))
    assert out_big.shape == (B_big, C)
    assert jnp.allclose(out_big, _ref(x_big, w1, b1, w2, b2, jnp.bfloat16),
                        atol=2e-3, rtol=2e-3)
    assert jnp.allclose(out_big, _ref(x_big, w1, b1, w2, b2),
                        atol=3e-2, rtol=3e-2)

    print("KERNEL_OK")
</pallas_src>

<mosaic_0001>
module attributes {stable_mosaic.version = 11 : i64} {
  func.func @mlp_kernel(%arg0: i32, %arg1: memref<8x784xf32, #tpu.memory_space<vmem>>, %arg2: memref<784x128xbf16, #tpu.memory_space<vmem>>, %arg3: memref<1x128xf32, #tpu.memory_space<vmem>>, %arg4: memref<128x10xbf16, #tpu.memory_space<vmem>>, %arg5: memref<1x10xf32, #tpu.memory_space<vmem>>, %arg6: memref<8x10xf32, #tpu.memory_space<vmem>>) attributes {dimension_semantics = [#tpu.dimension_semantics<parallel>], iteration_bounds = array<i64: 1>, scalar_prefetch = 0 : i64, scratch_operands = 0 : i64, tpu.core_type = #tpu.core_type<tc>, window_params = [{transform_indices = @transform_0, window_bounds = array<i64: 8, 784>}, {pipeline_mode = #tpu.pipeline_mode<synchronous>, transform_indices = @transform_1, window_bounds = array<i64: 784, 128>}, {pipeline_mode = #tpu.pipeline_mode<synchronous>, transform_indices = @transform_2, window_bounds = array<i64: 1, 128>}, {pipeline_mode = #tpu.pipeline_mode<synchronous>, transform_indices = @transform_3, window_bounds = array<i64: 128, 10>}, {pipeline_mode = #tpu.pipeline_mode<synchronous>, transform_indices = @transform_4, window_bounds = array<i64: 1, 10>}, {transform_indices = @transform_5, window_bounds = array<i64: 8, 10>}]} {
    %c0 = arith.constant 0 : index
    %c0_0 = arith.constant 0 : index
    %0 = vector.load %arg1[%c0, %c0_0] : memref<8x784xf32, #tpu.memory_space<vmem>>, vector<8x784xf32>
    %1 = arith.truncf %0 : vector<8x784xf32> to vector<8x784xbf16>
    %c0_1 = arith.constant 0 : index
    %c0_2 = arith.constant 0 : index
    %2 = vector.load %arg2[%c0_1, %c0_2] : memref<784x128xbf16, #tpu.memory_space<vmem>>, vector<784x128xbf16>
    %cst = arith.constant dense<0.000000e+00> : vector<8x128xf32>
    %3 = tpu.matmul %1, %2, %cst {dimension_numbers = #tpu.dot_dimension_numbers<[1], [0], [0], [1], [0, 0, 1, 1], [], []>} : vector<8x784xbf16>, vector<784x128xbf16>, vector<8x128xf32> -> vector<8x128xf32>
    %c0_3 = arith.constant 0 : index
    %c0_4 = arith.constant 0 : index
    %4 = vector.load %arg3[%c0_3, %c0_4] : memref<1x128xf32, #tpu.memory_space<vmem>>, vector<1x128xf32>
    %5 = vector.broadcast %4 : vector<1x128xf32> to vector<8x128xf32>
    %6 = arith.addf %3, %5 : vector<8x128xf32>
    %cst_5 = arith.constant 0.000000e+00 : f32
    %7 = vector.broadcast %cst_5 : f32 to vector<8x128xf32>
    %8 = arith.maximumf %6, %7 : vector<8x128xf32>
    %9 = arith.truncf %8 : vector<8x128xf32> to vector<8x128xbf16>
    %c0_6 = arith.constant 0 : index
    %c0_7 = arith.constant 0 : index
    %10 = vector.load %arg4[%c0_6, %c0_7] : memref<128x10xbf16, #tpu.memory_space<vmem>>, vector<128x10xbf16>
    %cst_8 = arith.constant dense<0.000000e+00> : vector<8x10xf32>
    %11 = tpu.matmul %9, %10, %cst_8 {dimension_numbers = #tpu.dot_dimension_numbers<[1], [0], [0], [1], [0, 0, 1, 1], [], []>} : vector<8x128xbf16>, vector<128x10xbf16>, vector<8x10xf32> -> vector<8x10xf32>
    %c0_9 = arith.constant 0 : index
    %c0_10 = arith.constant 0 : index
    %12 = vector.load %arg5[%c0_9, %c0_10] : memref<1x10xf32, #tpu.memory_space<vmem>>, vector<1x10xf32>
    %13 = vector.broadcast %12 : vector<1x10xf32> to vector<8x10xf32>
    %14 = arith.addf %11, %13 : vector<8x10xf32>
    %c0_11 = arith.constant 0 : index
    %c0_12 = arith.constant 0 : index
    %15 = vector.load %arg6[%c0_11, %c0_12] : memref<8x10xf32, #tpu.memory_space<vmem>>, vector<8x10xf32>
    tpu.vector_store %arg6[%c0_11, %c0_12], %14 {strides = array<i32>} : memref<8x10xf32, #tpu.memory_space<vmem>>, vector<8x10xf32>,
    return
  }
  func.func @transform_0(%arg0: i32) -> (i32, i32) {
    %c0_i32 = arith.constant 0 : i32
    %c0_i32_0 = arith.constant 0 : i32
    return %arg0, %c0_i32 : i32, i32
  }
  func.func @transform_1(%arg0: i32) -> (i32, i32) {
    %c0_i32 = arith.constant 0 : i32
    %c0_i32_0 = arith.constant 0 : i32
    %c0_i32_1 = arith.constant 0 : i32
    return %c0_i32, %c0_i32_0 : i32, i32
  }
  func.func @transform_2(%arg0: i32) -> (i32, i32) {
    %c0_i32 = arith.constant 0 : i32
    %c0_i32_0 = arith.constant 0 : i32
    %c0_i32_1 = arith.constant 0 : i32
    return %c0_i32, %c0_i32_0 : i32, i32
  }
  func.func @transform_3(%arg0: i32) -> (i32, i32) {
    %c0_i32 = arith.constant 0 : i32
    %c0_i32_0 = arith.constant 0 : i32
    %c0_i32_1 = arith.constant 0 : i32
    return %c0_i32, %c0_i32_0 : i32, i32
  }
  func.func @transform_4(%arg0: i32) -> (i32, i32) {
    %c0_i32 = arith.constant 0 : i32
    %c0_i32_0 = arith.constant 0 : i32
    %c0_i32_1 = arith.constant 0 : i32
    return %c0_i32, %c0_i32_0 : i32, i32
  }
  func.func @transform_5(%arg0: i32) -> (i32, i32) {
    %c0_i32 = arith.constant 0 : i32
    %c0_i32_0 = arith.constant 0 : i32
    return %arg0, %c0_i32 : i32, i32
  }
}

</mosaic_0001>

<llo_original>
// kernel: mlp_forward.1
$region0: #{mlp_forward.1}
  #allocation0 [shape = 'u32[]', space=smem, size = 0x4, offset = 0x4, fixed_abs, tag = 'smem constant byte address 0x4 - core index']
  #allocation1 [shape = 'u32[144,128]{1,0:T(1,128)}', space=vmem, size = 0x12000, scoped, tag = 'internal scratch']
  %s0 = inlined_call_operand.vmem [shape: f32[8,784], index: 0, kind: input, shape index: {}]
  %s1 = inlined_call_operand.vmem [shape: bf16[784,128], index: 1, kind: input, shape index: {}]
  %s2 = inlined_call_operand.vmem [shape: f32[1,128], index: 2, kind: input, shape index: {}]
  %s3 = inlined_call_operand.vmem [shape: bf16[128,10], index: 3, kind: input, shape index: {}]
  %s4 = inlined_call_operand.vmem [shape: f32[1,10], index: 4, kind: input, shape index: {}]
  %s5 = inlined_call_operand.hbm [shape: f32[8,10], index: 5, kind: output, shape index: {}]
  %s6 = sld [smem:[#allocation0]]
  $region30: #{mlp_forward.1} parent=0
    _
  %s8 = ssub.s32 1, %s6
  %s9 = scalar_select 0, %s8, %s6
  $region1: #{mlp_forward.1} parent=0
    #allocation2 [shape = 'u8[4096]{0}', space=vmem, size = 0x1000, scoped, tag = 'output window, operand 0, single buffered']
    #allocation3 [shape = 's32[1]{0}', space=sflag, size = 0x4, scoped, tag = 'scoped memory for mlp_forward.1']
    %10 = vsyncpa [#allocation3], 0
    // Predicated region
    $region2: #{mlp_forward.1} parent=1 // pred_check
      _
    $region3: #{mlp_forward.1} parent=1 // pred_check_branch
      %12 = sbr.rel (0) target = $region5
    $region4: #{mlp_forward.1} parent=1 // pred_region
      _
    $region5: #{mlp_forward.1} parent=1 // pred_fallthru
      _
    // Predicated region
    $region6: #{mlp_forward.1} parent=1 // pred_check
      _
    $region7: #{mlp_forward.1} parent=1 // pred_check_branch
      %14 = sbr.rel (0) target = $region9
    $region8: #{mlp_forward.1} parent=1 // pred_region
      _
    $region9: #{mlp_forward.1} parent=1 // pred_fallthru
      _
    // Predicated region
    $region10: #{mlp_forward.1} parent=1 // pred_check
      _
    $region11: #{mlp_forward.1} parent=1 // pred_check_branch
      %16 = sbr.rel (0) target = $region13
    $region12: #{mlp_forward.1} parent=1 // pred_region
      _
    $region13: #{mlp_forward.1} parent=1 // pred_fallthru
      _
    // Predicated region
    $region14: #{mlp_forward.1} parent=1 // pred_check
      _
    $region15: #{mlp_forward.1} parent=1 // pred_check_branch
      %18 = sbr.rel (0) target = $region17
    $region16: #{mlp_forward.1} parent=1 // pred_region
      _
    $region17: #{mlp_forward.1} parent=1 // pred_fallthru
      _
    // Predicated region
    $region18: #{mlp_forward.1} parent=1 // pred_check
      _
    $region19: #{mlp_forward.1} parent=1 // pred_check_branch
      %20 = sbr.rel (0) target = $region21
    $region20: #{mlp_forward.1} parent=1 // pred_region
      _
    $region21: #{mlp_forward.1} parent=1 // pred_fallthru
      _
    %v22 = vld [vmem:[%s0] sm:$0xff]
    %v23 = vld [vmem:[%s0 + $0x8] sm:$0xff]
    %v24 = vld [vmem:[%s0 + $0x10] sm:$0xff]
    %v25 = vld [vmem:[%s0 + $0x18] sm:$0xff]
    %v26 = vld [vmem:[%s0 + $0x20] sm:$0xff]
    %v27 = vld [vmem:[%s0 + $0x28] sm:$0xff]
    %v28 = vld [vmem:[%s0 + $0x30] sm:$0xff]
    %v29 = vpack.c.bf16 %v22, %v22
    %v30 = vpack.c.bf16 %v23, %v23
    %v31 = vpack.c.bf16 %v24, %v24
    %v32 = vpack.c.bf16 %v25, %v25
    %v33 = vpack.c.bf16 %v26, %v26
    %v34 = vpack.c.bf16 %v27, %v27
    %v35 = vpack.c.bf16 %v28, %v28
    %v36 = vld [vmem:[%s1] sm:$0xf]
    %v37 = vld [vmem:[%s1 + $0x4] sm:$0xf]
    %v38 = vld [vmem:[%s1 + $0x8] sm:$0xf]
    %v39 = vld [vmem:[%s1 + $0xc] sm:$0xf]
    %v40 = vld [vmem:[%s1 + $0x10] sm:$0xf]
    %v41 = vld [vmem:[%s1 + $0x14] sm:$0xf]
    %v42 = vld [vmem:[%s1 + $0x18] sm:$0xf]
    %v43 = vld [vmem:[%s1 + $0x1c] sm:$0xf]
    %v44 = vld [vmem:[%s1 + $0x20] sm:$0xf]
    %v45 = vld [vmem:[%s1 + $0x24] sm:$0xf]
    %v46 = vld [vmem:[%s1 + $0x28] sm:$0xf]
    %v47 = vld [vmem:[%s1 + $0x2c] sm:$0xf]
    %v48 = vld [vmem:[%s1 + $0x30] sm:$0xf]
    %v49 = vld [vmem:[%s1 + $0x34] sm:$0xf]
    %v50 = vld [vmem:[%s1 + $0x38] sm:$0xf]
    %v51 = vld [vmem:[%s1 + $0x3c] sm:$0xf]
    %v52 = vld [vmem:[%s1 + $0x40] sm:$0xf]
    %v53 = vld [vmem:[%s1 + $0x44] sm:$0xf]
    %v54 = vld [vmem:[%s1 + $0x48] sm:$0xf]
    %v55 = vld [vmem:[%s1 + $0x4c] sm:$0xf]
    %v56 = vld [vmem:[%s1 + $0x50] sm:$0xf]
    %v57 = vld [vmem:[%s1 + $0x54] sm:$0xf]
    %v58 = vld [vmem:[%s1 + $0x58] sm:$0xf]
    %v59 = vld [vmem:[%s1 + $0x5c] sm:$0xf]
    %v60 = vld [vmem:[%s1 + $0x60] sm:$0xf]
    %v61 = vld [vmem:[%s1 + $0x64] sm:$0xf]
    %v62 = vld [vmem:[%s1 + $0x68] sm:$0xf]
    %v63 = vld [vmem:[%s1 + $0x6c] sm:$0xf]
    %v64 = vld [vmem:[%s1 + $0x70] sm:$0xf]
    %v65 = vld [vmem:[%s1 + $0x74] sm:$0xf]
    %v66 = vld [vmem:[%s1 + $0x78] sm:$0xf]
    %v67 = vld [vmem:[%s1 + $0x7c] sm:$0xf]
    %v68 = vld [vmem:[%s1 + $0x80] sm:$0xf]
    %v69 = vld [vmem:[%s1 + $0x84] sm:$0xf]
    %v70 = vld [vmem:[%s1 + $0x88] sm:$0xf]
    %v71 = vld [vmem:[%s1 + $0x8c] sm:$0xf]
    %v72 = vld [vmem:[%s1 + $0x90] sm:$0xf]
    %v73 = vld [vmem:[%s1 + $0x94] sm:$0xf]
    %v74 = vld [vmem:[%s1 + $0x98] sm:$0xf]
    %v75 = vld [vmem:[%s1 + $0x9c] sm:$0xf]
    %v76 = vld [vmem:[%s1 + $0xa0] sm:$0xf]
    %v77 = vld [vmem:[%s1 + $0xa4] sm:$0xf]
    %v78 = vld [vmem:[%s1 + $0xa8] sm:$0xf]
    %v79 = vld [vmem:[%s1 + $0xac] sm:$0xf]
    %v80 = vld [vmem:[%s1 + $0xb0] sm:$0xf]
    %v81 = vld [vmem:[%s1 + $0xb4] sm:$0xf]
    %v82 = vld [vmem:[%s1 + $0xb8] sm:$0xf]
    %v83 = vld [vmem:[%s1 + $0xbc] sm:$0xf]
    %v84 = vld [vmem:[%s1 + $0xc0] sm:$0xf]
    %v85 = vld [vmem:[%s1 + $0xc4] sm:$0xf]
    %v86 = vld [vmem:[%s1 + $0xc8] sm:$0xf]
    %v87 = vld [vmem:[%s1 + $0xcc] sm:$0xf]
    %v88 = vld [vmem:[%s1 + $0xd0] sm:$0xf]
    %v89 = vld [vmem:[%s1 + $0xd4] sm:$0xf]
    %v90 = vld [vmem:[%s1 + $0xd8] sm:$0xf]
    %v91 = vld [vmem:[%s1 + $0xdc] sm:$0xf]
    %v92 = vld [vmem:[%s1 + $0xe0] sm:$0xf]
    %v93 = vld [vmem:[%s1 + $0xe4] sm:$0xf]
    %v94 = vld [vmem:[%s1 + $0xe8] sm:$0xf]
    %v95 = vld [vmem:[%s1 + $0xec] sm:$0xf]
    %v96 = vld [vmem:[%s1 + $0xf0] sm:$0xf]
    %v97 = vld [vmem:[%s1 + $0xf4] sm:$0xf]
    %v98 = vld [vmem:[%s1 + $0xf8] sm:$0xf]
    %v99 = vld [vmem:[%s1 + $0xfc] sm:$0xf]
    %v100 = vld [vmem:[%s1 + $0x100] sm:$0xf]
    %v101 = vld [vmem:[%s1 + $0x104] sm:$0xf]
    %v102 = vld [vmem:[%s1 + $0x108] sm:$0xf]
    %v103 = vld [vmem:[%s1 + $0x10c] sm:$0xf]
    %v104 = vld [vmem:[%s1 + $0x110] sm:$0xf]
    %v105 = vld [vmem:[%s1 + $0x114] sm:$0xf]
    %v106 = vld [vmem:[%s1 + $0x118] sm:$0xf]
    %v107 = vld [vmem:[%s1 + $0x11c] sm:$0xf]
    %v108 = vld [vmem:[%s1 + $0x120] sm:$0xf]
    %v109 = vld [vmem:[%s1 + $0x124] sm:$0xf]
    %v110 = vld [vmem:[%s1 + $0x128] sm:$0xf]
    %v111 = vld [vmem:[%s1 + $0x12c] sm:$0xf]
    %v112 = vld [vmem:[%s1 + $0x130] sm:$0xf]
    %v113 = vld [vmem:[%s1 + $0x134] sm:$0xf]
    %v114 = vld [vmem:[%s1 + $0x138] sm:$0xf]
    %v115 = vld [vmem:[%s1 + $0x13c] sm:$0xf]
    %v116 = vld [vmem:[%s1 + $0x140] sm:$0xf]
    %v117 = vld [vmem:[%s1 + $0x144] sm:$0xf]
    %v118 = vld [vmem:[%s1 + $0x148] sm:$0xf]
    %v119 = vld [vmem:[%s1 + $0x14c] sm:$0xf]
    %v120 = vld [vmem:[%s1 + $0x150] sm:$0xf]
    %v121 = vld [vmem:[%s1 + $0x154] sm:$0xf]
    %v122 = vld [vmem:[%s1 + $0x158] sm:$0xf]
    %v123 = vld [vmem:[%s1 + $0x15c] sm:$0xf]
    %v124 = vld [vmem:[%s1 + $0x160] sm:$0xf]
    %v125 = vld [vmem:[%s1 + $0x164] sm:$0xf]
    %v126 = vld [vmem:[%s1 + $0x168] sm:$0xf]
    %v127 = vld [vmem:[%s1 + $0x16c] sm:$0xf]
    %v128 = vld [vmem:[%s1 + $0x170] sm:$0xf]
    %v129 = vld [vmem:[%s1 + $0x174] sm:$0xf]
    %v130 = vld [vmem:[%s1 + $0x178] sm:$0xf]
    %v131 = vld [vmem:[%s1 + $0x17c] sm:$0xf]
    %v132 = vld [vmem:[%s1 + $0x180] sm:$0xf]
    %v133 = vld [vmem:[%s1 + $0x184] sm:$0xf]
    %v134 = vld [vmem:[%s2] sm:$0x1]
    %v136 = vlaneseq
    %v137 = vshrl.u32 %v136, 7
    %v138 = vsub.s32 0, %v137
    %v139 = vrot.slane %v134, %v138
    %v239 = vunpack.c.l.b16 %v36
    %v240 = vunpack.c.l.b16 %v37
    %v241 = vunpack.c.l.b16 %v38
    %v242 = vunpack.c.l.b16 %v39
    %v243 = vunpack.c.l.b16 %v40
    %v244 = vunpack.c.l.b16 %v41
    %v245 = vunpack.c.l.b16 %v42
    %v246 = vunpack.c.l.b16 %v43
    %v247 = vunpack.c.l.b16 %v44
    %v248 = vunpack.c.l.b16 %v45
    %v249 = vunpack.c.l.b16 %v46
    %v250 = vunpack.c.l.b16 %v47
    %v251 = vunpack.c.l.b16 %v48
    %v252 = vunpack.c.l.b16 %v49
    %v253 = vunpack.c.l.b16 %v50
    %v254 = vunpack.c.l.b16 %v51
    %v255 = vunpack.c.l.b16 %v52
    %v256 = vunpack.c.l.b16 %v53
    %v257 = vunpack.c.l.b16 %v54
    %v258 = vunpack.c.l.b16 %v55
    %v259 = vunpack.c.l.b16 %v56
    %v260 = vunpack.c.l.b16 %v57
    %v261 = vunpack.c.l.b16 %v58
    %v262 = vunpack.c.l.b16 %v59
    %v263 = vunpack.c.l.b16 %v60
    %v264 = vunpack.c.l.b16 %v61
    %v265 = vunpack.c.l.b16 %v62
    %v266 = vunpack.c.l.b16 %v63
    %v267 = vunpack.c.l.b16 %v64
    %v268 = vunpack.c.l.b16 %v65
    %v269 = vunpack.c.l.b16 %v66
    %v270 = vunpack.c.l.b16 %v67
    %v271 = vunpack.c.l.b16 %v68
    %v272 = vunpack.c.l.b16 %v69
    %v273 = vunpack.c.l.b16 %v70
    %v274 = vunpack.c.l.b16 %v71
    %v275 = vunpack.c.l.b16 %v72
    %v276 = vunpack.c.l.b16 %v73
    %v277 = vunpack.c.l.b16 %v74
    %v278 = vunpack.c.l.b16 %v75
    %v279 = vunpack.c.l.b16 %v76
    %v280 = vunpack.c.l.b16 %v77
    %v281 = vunpack.c.l.b16 %v78
    %v282 = vunpack.c.l.b16 %v79
    %v283 = vunpack.c.l.b16 %v80
    %v284 = vunpack.c.l.b16 %v81
    %v285 = vunpack.c.l.b16 %v82
    %v286 = vunpack.c.l.b16 %v83
    %v287 = vunpack.c.l.b16 %v84
    %v288 = vunpack.c.l.b16 %v85
    %v289 = vunpack.c.l.b16 %v86
    %v290 = vunpack.c.l.b16 %v87
    %v291 = vunpack.c.l.b16 %v88
    %v292 = vunpack.c.l.b16 %v89
    %v293 = vunpack.c.l.b16 %v90
    %v294 = vunpack.c.l.b16 %v91
    %v295 = vunpack.c.l.b16 %v92
    %v296 = vunpack.c.l.b16 %v93
    %v297 = vunpack.c.l.b16 %v94
    %v298 = vunpack.c.l.b16 %v95
    %v299 = vunpack.c.l.b16 %v96
    %v300 = vunpack.c.l.b16 %v97
    %v301 = vunpack.c.l.b16 %v98
    %v302 = vunpack.c.l.b16 %v99
    %v303 = vunpack.c.l.b16 %v100
    %v304 = vunpack.c.l.b16 %v101
    %v305 = vunpack.c.l.b16 %v102
    %v306 = vunpack.c.l.b16 %v103
    %v307 = vunpack.c.l.b16 %v104
    %v308 = vunpack.c.l.b16 %v105
    %v309 = vunpack.c.l.b16 %v106
    %v310 = vunpack.c.l.b16 %v107
    %v311 = vunpack.c.l.b16 %v108
    %v312 = vunpack.c.l.b16 %v109
    %v313 = vunpack.c.l.b16 %v110
    %v314 = vunpack.c.l.b16 %v111
    %v315 = vunpack.c.l.b16 %v112
    %v316 = vunpack.c.l.b16 %v113
    %v317 = vunpack.c.l.b16 %v114
    %v318 = vunpack.c.l.b16 %v115
    %v319 = vunpack.c.l.b16 %v116
    %v320 = vunpack.c.l.b16 %v117
    %v321 = vunpack.c.l.b16 %v118
    %v322 = vunpack.c.l.b16 %v119
    %v323 = vunpack.c.l.b16 %v120
    %v324 = vunpack.c.l.b16 %v121
    %v325 = vunpack.c.l.b16 %v122
    %v326 = vunpack.c.l.b16 %v123
    %v327 = vunpack.c.l.b16 %v124
    %v328 = vunpack.c.l.b16 %v125
    %v329 = vunpack.c.l.b16 %v126
    %v330 = vunpack.c.l.b16 %v127
    %v331 = vunpack.c.l.b16 %v128
    %v332 = vunpack.c.l.b16 %v129
    %v333 = vunpack.c.l.b16 %v130
    %v334 = vunpack.c.l.b16 %v131
    %v335 = vunpack.c.l.b16 %v132
    %v336 = vunpack.c.l.b16 %v133
    %v337 = vpack.c.b16 %v240, %v239
    %v338 = vpack.c.b16 %v242, %v241
    %v339 = vpack.c.b16 %v244, %v243
    %v340 = vpack.c.b16 %v246, %v245
    %v341 = vpack.c.b16 %v248, %v247
    %v342 = vpack.c.b16 %v250, %v249
    %v343 = vpack.c.b16 %v252, %v251
    %v344 = vpack.c.b16 %v254, %v253
    %v345 = vpack.c.b16 %v256, %v255
    %v346 = vpack.c.b16 %v258, %v257
    %v347 = vpack.c.b16 %v260, %v259
    %v348 = vpack.c.b16 %v262, %v261
    %v349 = vpack.c.b16 %v264, %v263
    %v350 = vpack.c.b16 %v266, %v265
    %v351 = vpack.c.b16 %v268, %v267
    %v352 = vpack.c.b16 %v270, %v269
    %v353 = vpack.c.b16 %v272, %v271
    %v354 = vpack.c.b16 %v274, %v273
    %v355 = vpack.c.b16 %v276, %v275
    %v356 = vpack.c.b16 %v278, %v277
    %v357 = vpack.c.b16 %v280, %v279
    %v358 = vpack.c.b16 %v282, %v281
    %v359 = vpack.c.b16 %v284, %v283
    %v360 = vpack.c.b16 %v286, %v285
    %v361 = vpack.c.b16 %v288, %v287
    %v362 = vpack.c.b16 %v290, %v289
    %v363 = vpack.c.b16 %v292, %v291
    %v364 = vpack.c.b16 %v294, %v293
    %v365 = vpack.c.b16 %v296, %v295
    %v366 = vpack.c.b16 %v298, %v297
    %v367 = vpack.c.b16 %v300, %v299
    %v368 = vpack.c.b16 %v302, %v301
    %v369 = vpack.c.b16 %v304, %v303
    %v370 = vpack.c.b16 %v306, %v305
    %v371 = vpack.c.b16 %v308, %v307
    %v372 = vpack.c.b16 %v310, %v309
    %v373 = vpack.c.b16 %v312, %v311
    %v374 = vpack.c.b16 %v314, %v313
    %v375 = vpack.c.b16 %v316, %v315
    %v376 = vpack.c.b16 %v318, %v317
    %v377 = vpack.c.b16 %v320, %v319
    %v378 = vpack.c.b16 %v322, %v321
    %v379 = vpack.c.b16 %v324, %v323
    %v380 = vpack.c.b16 %v326, %v325
    %v381 = vpack.c.b16 %v328, %v327
    %v382 = vpack.c.b16 %v330, %v329
    %v383 = vpack.c.b16 %v332, %v331
    %v384 = vpack.c.b16 %v334, %v333
    %v385 = vpack.c.b16 %v336, %v335
    %vm435 = vcmask 130048
    %v437 = vsel %vm435, %v35, 0
    %439 = vmatprep.subr.bf16.mxu0 0
    %440 = vmatpush1.bf16.msra.mxu0 %v337
    %441 = vmatprep.subr.bf16.mxu0 0
    %442 = vmatpush1.bf16.msra.mxu0 %v338
    %443 = vmatprep.subr.bf16.mxu0 0
    %444 = vmatpush1.bf16.msra.mxu0 %v339
    %445 = vmatprep.subr.bf16.mxu0 0
    %446 = vmatpush1.bf16.msra.mxu0 %v340
    %447 = vmatprep.subr.bf16.mxu0 0
    %448 = vmatpush1.bf16.msra.mxu0 %v341
    %449 = vmatprep.subr.bf16.mxu0 0
    %450 = vmatpush1.bf16.msra.mxu0 %v342
    %451 = vmatprep.subr.bf16.mxu0 0
    %452 = vmatpush1.bf16.msra.mxu0 %v343
    %453 = vmatprep.subr.bf16.mxu0 0
    %454 = vmatpush1.bf16.msra.mxu0 %v344
    %455 = vmatprep.subr.bf16.mxu0 0
    %456 = vmatpush1.bf16.msra.mxu0 %v345
    %457 = vmatprep.subr.bf16.mxu0 0
    %458 = vmatpush1.bf16.msra.mxu0 %v346
    %459 = vmatprep.subr.bf16.mxu0 0
    %460 = vmatpush1.bf16.msra.mxu0 %v347
    %461 = vmatprep.subr.bf16.mxu0 0
    %462 = vmatpush1.bf16.msra.mxu0 %v348
    %463 = vmatprep.subr.bf16.mxu0 0
    %464 = vmatpush1.bf16.msra.mxu0 %v349
    %465 = vmatprep.subr.bf16.mxu0 0
    %466 = vmatpush1.bf16.msra.mxu0 %v350
    %467 = vmatprep.subr.bf16.mxu0 0
    %468 = vmatpush1.bf16.msra.mxu0 %v351
    %469 = vmatprep.subr.bf16.mxu0 0
    %470 = vmatpush1.bf16.msra.mxu0 %v352
    %471 = vmatprep.mubr.bf16.mxu0 %v30
    %472 = vmatmul.mubr.bf16.gmra.mrb[0].mxu0 %v29
    %v473 = vpop.f32.mrb[0].mxu0
    %v474 = vadd.f32 %v139, %v473
    %v475 = vpop.f32.mrb[0].mxu0
    %v476 = vpop.f32.mrb[0].mxu0
    %v477 = vpop.f32.mrb[0].mxu0
    %478 = vdwg.mxu0
    %479 = vmatprep.subr.bf16.mxu0 0
    %480 = vmatpush1.bf16.msra.mxu0 %v353
    %481 = vmatprep.subr.bf16.mxu0 0
    %482 = vmatpush1.bf16.msra.mxu0 %v354
    %483 = vmatprep.subr.bf16.mxu0 0
    %484 = vmatpush1.bf16.msra.mxu0 %v355
    %485 = vmatprep.subr.bf16.mxu0 0
    %486 = vmatpush1.bf16.msra.mxu0 %v356
    %487 = vmatprep.subr.bf16.mxu0 0
    %488 = vmatpush1.bf16.msra.mxu0 %v357
    %489 = vmatprep.subr.bf16.mxu0 0
    %490 = vmatpush1.bf16.msra.mxu0 %v358
    %491 = vmatprep.subr.bf16.mxu0 0
    %492 = vmatpush1.bf16.msra.mxu0 %v359
    %493 = vmatprep.subr.bf16.mxu0 0
    %494 = vmatpush1.bf16.msra.mxu0 %v360
    %495 = vmatprep.subr.bf16.mxu0 0
    %496 = vmatpush1.bf16.msra.mxu0 %v361
    %497 = vmatprep.subr.bf16.mxu0 0
    %498 = vmatpush1.bf16.msra.mxu0 %v362
    %499 = vmatprep.subr.bf16.mxu0 0
    %500 = vmatpush1.bf16.msra.mxu0 %v363
    %501 = vmatprep.subr.bf16.mxu0 0
    %502 = vmatpush1.bf16.msra.mxu0 %v364
    %503 = vmatprep.subr.bf16.mxu0 0
    %504 = vmatpush1.bf16.msra.mxu0 %v365
    %505 = vmatprep.subr.bf16.mxu0 0
    %506 = vmatpush1.bf16.msra.mxu0 %v366
    %507 = vmatprep.subr.bf16.mxu0 0
    %508 = vmatpush1.bf16.msra.mxu0 %v367
    %509 = vmatprep.subr.bf16.mxu0 0
    %510 = vmatpush1.bf16.msra.mxu0 %v368
    %511 = vmatprep.mubr.bf16.mxu0 %v32
    %512 = vmatmul.mubr.bf16.gmra.mrb[0].mxu0 %v31
    %v513 = vpop.f32.mrb[0].mxu0
    %v514 = vadd.f32 %v474, %v513
    %v515 = vpop.f32.mrb[0].mxu0
    %v516 = vpop.f32.mrb[0].mxu0
    %v517 = vpop.f32.mrb[0].mxu0
    %518 = vdwg.mxu0
    %519 = vmatprep.subr.bf16.mxu0 0
    %520 = vmatpush1.bf16.msra.mxu0 %v369
    %521 = vmatprep.subr.bf16.mxu0 0
    %522 = vmatpush1.bf16.msra.mxu0 %v370
    %523 = vmatprep.subr.bf16.mxu0 0
    %524 = vmatpush1.bf16.msra.mxu0 %v371
    %525 = vmatprep.subr.bf16.mxu0 0
    %526 = vmatpush1.bf16.msra.mxu0 %v372
    %527 = vmatprep.subr.bf16.mxu0 0
    %528 = vmatpush1.bf16.msra.mxu0 %v373
    %529 = vmatprep.subr.bf16.mxu0 0
    %530 = vmatpush1.bf16.msra.mxu0 %v374
    %531 = vmatprep.subr.bf16.mxu0 0
    %532 = vmatpush1.bf16.msra.mxu0 %v375
    %533 = vmatprep.subr.bf16.mxu0 0
    %534 = vmatpush1.bf16.msra.mxu0 %v376
    %535 = vmatprep.subr.bf16.mxu0 0
    %536 = vmatpush1.bf16.msra.mxu0 %v377
    %537 = vmatprep.subr.bf16.mxu0 0
    %538 = vmatpush1.bf16.msra.mxu0 %v378
    %539 = vmatprep.subr.bf16.mxu0 0
    %540 = vmatpush1.bf16.msra.mxu0 %v379
    %541 = vmatprep.subr.bf16.mxu0 0
    %542 = vmatpush1.bf16.msra.mxu0 %v380
    %543 = vmatprep.subr.bf16.mxu0 0
    %544 = vmatpush1.bf16.msra.mxu0 %v381
    %545 = vmatprep.subr.bf16.mxu0 0
    %546 = vmatpush1.bf16.msra.mxu0 %v382
    %547 = vmatprep.subr.bf16.mxu0 0
    %548 = vmatpush1.bf16.msra.mxu0 %v383
    %549 = vmatprep.subr.bf16.mxu0 0
    %550 = vmatpush1.bf16.msra.mxu0 %v384
    %551 = vmatprep.mubr.bf16.mxu0 %v34
    %552 = vmatmul.mubr.bf16.gmra.mrb[0].mxu0 %v33
    %v553 = vpop.f32.mrb[0].mxu0
    %v554 = vadd.f32 %v514, %v553
    %v555 = vpop.f32.mrb[0].mxu0
    %v556 = vpop.f32.mrb[0].mxu0
    %v557 = vpop.f32.mrb[0].mxu0
    %558 = vdwg.mxu0
    %559 = vmatprep.subr.bf16.mxu0 0
    %560 = vmatpush1.bf16.msra.mxu0 %v385
    %561 = vmatprep.subr.bf16.mxu0 0
    %562 = vmatpush1.bf16.msra.mxu0 0
    %563 = vmatprep.subr.bf16.mxu0 0
    %564 = vmatpush1.bf16.msra.mxu0 0
    %565 = vmatprep.subr.bf16.mxu0 0
    %566 = vmatpush1.bf16.msra.mxu0 0
    %567 = vmatprep.subr.bf16.mxu0 0
    %568 = vmatpush1.bf16.msra.mxu0 0
    %569 = vmatprep.subr.bf16.mxu0 0
    %570 = vmatpush1.bf16.msra.mxu0 0
    %571 = vmatprep.subr.bf16.mxu0 0
    %572 = vmatpush1.bf16.msra.mxu0 0
    %573 = vmatprep.subr.bf16.mxu0 0
    %574 = vmatpush1.bf16.msra.mxu0 0
    %575 = vmatprep.subr.bf16.mxu0 0
    %576 = vmatpush1.bf16.msra.mxu0 0
    %577 = vmatprep.subr.bf16.mxu0 0
    %578 = vmatpush1.bf16.msra.mxu0 0
    %579 = vmatprep.subr.bf16.mxu0 0
    %580 = vmatpush1.bf16.msra.mxu0 0
    %581 = vmatprep.subr.bf16.mxu0 0
    %582 = vmatpush1.bf16.msra.mxu0 0
    %583 = vmatprep.subr.bf16.mxu0 0
    %584 = vmatpush1.bf16.msra.mxu0 0
    %585 = vmatprep.subr.bf16.mxu0 0
    %586 = vmatpush1.bf16.msra.mxu0 0
    %587 = vmatprep.subr.bf16.mxu0 0
    %588 = vmatpush1.bf16.msra.mxu0 0
    %589 = vmatprep.subr.bf16.mxu0 0
    %590 = vmatpush1.bf16.msra.mxu0 0
    %591 = vmatprep.mubr.bf16.mxu0 0
    %592 = vmatmul.mubr.bf16.gmra.mrb[0].mxu0 %v437
    %v593 = vpop.f32.mrb[0].mxu0
    %v594 = vadd.f32 %v554, %v593
    %v595 = vpop.f32.mrb[0].mxu0
    %v596 = vpop.f32.mrb[0].mxu0
    %v597 = vpop.f32.mrb[0].mxu0
    %598 = vdwg.mxu0
    %v599 = vmax.f32 %v594, 0.0
    %v600 = vpack.c.bf16 %v599, %v599
    %v601 = vld [vmem:[%s3] sm:$0xf]
    %v602 = vld [vmem:[%s3 + $0x4] sm:$0xf]
    %v603 = vld [vmem:[%s3 + $0x8] sm:$0xf]
    %v604 = vld [vmem:[%s3 + $0xc] sm:$0xf]
    %v605 = vld [vmem:[%s3 + $0x10] sm:$0xf]
    %v606 = vld [vmem:[%s3 + $0x14] sm:$0xf]
    %v607 = vld [vmem:[%s3 + $0x18] sm:$0xf]
    %v608 = vld [vmem:[%s3 + $0x1c] sm:$0xf]
    %v609 = vld [vmem:[%s3 + $0x20] sm:$0xf]
    %v610 = vld [vmem:[%s3 + $0x24] sm:$0xf]
    %v611 = vld [vmem:[%s3 + $0x28] sm:$0xf]
    %v612 = vld [vmem:[%s3 + $0x2c] sm:$0xf]
    %v613 = vld [vmem:[%s3 + $0x30] sm:$0xf]
    %v614 = vld [vmem:[%s3 + $0x34] sm:$0xf]
    %v615 = vld [vmem:[%s3 + $0x38] sm:$0xf]
    %v616 = vld [vmem:[%s3 + $0x3c] sm:$0xf]
    %v617 = vld [vmem:[%s4] sm:$0x1]
    %v619 = vlaneseq
    %v620 = vshrl.u32 %v619, 7
    %v621 = vsub.s32 0, %v620
    %v622 = vrot.slane %v617, %v621
    %v640 = vunpack.c.l.b16 %v601
    %v641 = vunpack.c.l.b16 %v602
    %v642 = vunpack.c.l.b16 %v603
    %v643 = vunpack.c.l.b16 %v604
    %v644 = vunpack.c.l.b16 %v605
    %v645 = vunpack.c.l.b16 %v606
    %v646 = vunpack.c.l.b16 %v607
    %v647 = vunpack.c.l.b16 %v608
    %v648 = vunpack.c.l.b16 %v609
    %v649 = vunpack.c.l.b16 %v610
    %v650 = vunpack.c.l.b16 %v611
    %v651 = vunpack.c.l.b16 %v612
    %v652 = vunpack.c.l.b16 %v613
    %v653 = vunpack.c.l.b16 %v614
    %v654 = vunpack.c.l.b16 %v615
    %v655 = vunpack.c.l.b16 %v616
    %v656 = vpack.c.b16 %v641, %v640
    %v657 = vpack.c.b16 %v643, %v642
    %v658 = vpack.c.b16 %v645, %v644
    %v659 = vpack.c.b16 %v647, %v646
    %v660 = vpack.c.b16 %v649, %v648
    %v661 = vpack.c.b16 %v651, %v650
    %v662 = vpack.c.b16 %v653, %v652
    %v663 = vpack.c.b16 %v655, %v654
    %672 = vmatprep.subr.bf16.mxu0 0
    %673 = vmatpush1.bf16.msra.mxu0 %v656
    %674 = vmatprep.subr.bf16.mxu0 0
    %675 = vmatpush1.bf16.msra.mxu0 %v657
    %676 = vmatprep.subr.bf16.mxu0 0
    %677 = vmatpush1.bf16.msra.mxu0 %v658
    %678 = vmatprep.subr.bf16.mxu0 0
    %679 = vmatpush1.bf16.msra.mxu0 %v659
    %680 = vmatprep.subr.bf16.mxu0 0
    %681 = vmatpush1.bf16.msra.mxu0 %v660
    %682 = vmatprep.subr.bf16.mxu0 0
    %683 = vmatpush1.bf16.msra.mxu0 %v661
    %684 = vmatprep.subr.bf16.mxu0 0
    %685 = vmatpush1.bf16.msra.mxu0 %v662
    %686 = vmatprep.subr.bf16.mxu0 0
    %687 = vmatpush1.bf16.msra.mxu0 %v663
    %688 = vmatprep.subr.bf16.mxu0 0
    %689 = vmatpush1.bf16.msra.mxu0 0
    %690 = vmatprep.subr.bf16.mxu0 0
    %691 = vmatpush1.bf16.msra.mxu0 0
    %692 = vmatprep.subr.bf16.mxu0 0
    %693 = vmatpush1.bf16.msra.mxu0 0
    %694 = vmatprep.subr.bf16.mxu0 0
    %695 = vmatpush1.bf16.msra.mxu0 0
    %696 = vmatprep.subr.bf16.mxu0 0
    %697 = vmatpush1.bf16.msra.mxu0 0
    %698 = vmatprep.subr.bf16.mxu0 0
    %699 = vmatpush1.bf16.msra.mxu0 0
    %700 = vmatprep.subr.bf16.mxu0 0
    %701 = vmatpush1.bf16.msra.mxu0 0
    %702 = vmatprep.subr.bf16.mxu0 0
    %703 = vmatpush1.bf16.msra.mxu0 0
    %704 = vmatprep.mubr.bf16.mxu0 0
    %705 = vmatmul.mubr.bf16.gmra.mrb[0].mxu0 %v600
    %v706 = vpop.f32.mrb[0].mxu0
    %v707 = vadd.f32 %v622, %v706
    %v708 = vpop.f32.mrb[0].mxu0
    %v709 = vpop.f32.mrb[0].mxu0
    %v710 = vpop.f32.mrb[0].mxu0
    %711 = vdwg.mxu0
    %vm712 = vcmask 80896
    %713 = vst.msk [vmem:[#allocation2] sm:$0xff] %vm712, %v707
    // Predicated region
    $region22: #{mlp_forward.1} parent=1 // pred_check
      _
    $region23: #{mlp_forward.1} parent=1 // pred_check_branch
      %715 = sbr.rel (0) target = $region25
    $region24: #{mlp_forward.1} parent=1 // pred_region
      %s717 = ssub.s32 128, 128
      %718 = vsyncadd [#allocation3], %s717
      %s720 = sshll.u32 [#allocation2], 4
      %s721 = int_to_ptr.vmem [resolvable:$true] %s720
      %723 = dma.vmem_to_hbm [thread:$0]  %s721, 128, %s5, [#allocation3]
    $region25: #{mlp_forward.1} parent=1 // pred_fallthru
      _
    // Predicated region
    $region26: #{mlp_forward.1} parent=1 // pred_check
      _
    $region27: #{mlp_forward.1} parent=1 // pred_check_branch
      %725 = sbr.rel (0) target = $region29
    $region28: #{mlp_forward.1} parent=1 // pred_region
      %726 = dma.done [#allocation3], 128
    $region29: #{mlp_forward.1} parent=1 // pred_fallthru
      _
    %727 = vsyncpa [#allocation3], 1

</llo_original>
